<compile_context>
chip_gen: v6e
topology: v6e:2x2x1
jax: 0.10.0
libtpu: 0.0.40
codegen_flags: <defaults>
</compile_context>

<pallas_src>
import math

import jax
import jax.numpy as jnp
from jax import lax
from jax.experimental import pallas as pl
from jax.experimental.pallas import tpu as pltpu


def _round_up(x, m):
    return (x + m - 1) // m * m


def _maybe_pad2(a, rows, cols):
    """Zero-pad a 2D array up to (rows, cols); no-op if already that shape."""
    if a.shape == (rows, cols):
        return a
    return jnp.pad(a, ((0, rows - a.shape[0]), (0, cols - a.shape[1])))


# ---------------------------------------------------------------------------
# Pass 1: weight reparameterization, once per forward (not once per batch tile).
#   W = W_mu + exp(W_log_sigma) * eps
# Padded regions of mu and eps are zero, so padded W is exactly zero (exp(0)*0=0).
# ---------------------------------------------------------------------------
def _sample_weight_kernel(wmu_ref, wls_ref, eps_ref, w_ref):
    w_ref[...] = wmu_ref[...] + jnp.exp(wls_ref[...]) * eps_ref[...]


# ---------------------------------------------------------------------------
# Pass 2: y = x @ W.T + b
# (m, n, k) grid; out_ref's block index (i, j) is constant across k, so it stays
# resident in VMEM; initialize it with the bias at k==0 and accumulate the MXU
# partial products directly into it (no scratch accumulator, no epilogue copy).
# ---------------------------------------------------------------------------
def _linear_bias_kernel(x_ref, w_ref, b_ref, out_ref):
    k = pl.program_id(2)

    @pl.when(k == 0)
    def _():
        out_ref[...] = jnp.broadcast_to(b_ref[...], out_ref.shape).astype(out_ref.dtype)

    # x: (tm, tk), w: (tn, tk) -> contract the shared last (lane) dim on the MXU.
    out_ref[...] += lax.dot_general(
        x_ref[...], w_ref[...],
        dimension_numbers=(((1,), (1,)), ((), ())),
        preferred_element_type=jnp.float32)


def hierarchical_bayes_linear(x, weight_mu, weight_log_sigma,
                              bias_mu, bias_log_sigma, key):
    """Pallas TPU forward of HierarchicalBayesLinear (bias=True).

    x:                            (B, in_features)  float32
    weight_mu, weight_log_sigma:  (out, in)         float32
    bias_mu, bias_log_sigma:      (out,)            float32
    key:                          jax PRNG key driving the per-forward eps draws
    returns:                      (B, out)          float32
    """
    B, in_f = x.shape
    out_f, _ = weight_mu.shape

    # One eps draw per forward, shared across the whole batch (= torch.randn_like).
    k_w, k_b = jax.random.split(key)
    eps_w = jax.random.normal(k_w, (out_f, in_f), jnp.float32)
    eps_b = jax.random.normal(k_b, (out_f,), jnp.float32)

    # Tiles: lane dims multiples of 128, sublanes multiples of 8. tm/tn up to
    # 256/512 match the 2x256^2 MXU on v6e/v7x; tk up to 1024 amortizes grid-step
    # overhead while the double-buffered working set stays ~7 MiB (<< 64 MiB v7x VMEM).
    tm = min(_round_up(B, 8), 256)
    tn = min(_round_up(out_f, 128), 512)
    tk = min(_round_up(in_f, 128), 1024)

    m_pad = _round_up(B, tm)
    n_pad = _round_up(out_f, tn)
    k_pad = _round_up(in_f, tk)

    xp = _maybe_pad2(x.astype(jnp.float32), m_pad, k_pad)
    wmu = _maybe_pad2(weight_mu.astype(jnp.float32), n_pad, k_pad)
    wls = _maybe_pad2(weight_log_sigma.astype(jnp.float32), n_pad, k_pad)
    epsw = _maybe_pad2(eps_w, n_pad, k_pad)

    # Bias reparameterization: out_features elements -> plain JAX is negligible.
    bias = (bias_mu.astype(jnp.float32)
            + jnp.exp(bias_log_sigma.astype(jnp.float32)) * eps_b)
    b_pad = _maybe_pad2(bias.reshape(1, -1), 1, n_pad)

    # ---- Pass 1: sample W once; matmul then reads a single weight stream. ----
    w_sampled = pl.pallas_call(
        _sample_weight_kernel,
        out_shape=jax.ShapeDtypeStruct((n_pad, k_pad), jnp.float32),
        grid=(n_pad // tn, k_pad // tk),
        in_specs=[
            pl.BlockSpec((tn, tk), lambda j, k: (j, k)),   # W_mu
            pl.BlockSpec((tn, tk), lambda j, k: (j, k)),   # W_log_sigma
            pl.BlockSpec((tn, tk), lambda j, k: (j, k)),   # eps_W
        ],
        out_specs=pl.BlockSpec((tn, tk), lambda j, k: (j, k)),
        compiler_params=pltpu.CompilerParams(
            dimension_semantics=("parallel", "parallel")),
    )(wmu, wls, epsw)

    # ---- Pass 2: tiled matmul + bias, accumulating directly into out_ref. ----
    grid = (m_pad // tm, n_pad // tn, k_pad // tk)
    out = pl.pallas_call(
        _linear_bias_kernel,
        out_shape=jax.ShapeDtypeStruct((m_pad, n_pad), jnp.float32),
        grid_spec=pltpu.PrefetchScalarGridSpec(
            num_scalar_prefetch=0,
            grid=grid,
            in_specs=[
                pl.BlockSpec((tm, tk), lambda i, j, k: (i, k)),   # x
                pl.BlockSpec((tn, tk), lambda i, j, k: (j, k)),   # W (sampled)
                pl.BlockSpec((1, tn), lambda i, j, k: (0, j)),    # bias
            ],
            out_specs=pl.BlockSpec((tm, tn), lambda i, j, k: (i, j)),
        ),
        compiler_params=pltpu.CompilerParams(
            dimension_semantics=("parallel", "parallel", "arbitrary"),
            vmem_limit_bytes=48 * 1024 * 1024,
        ),
    )(xp, w_sampled, b_pad)

    return out[:B, :out_f]


# TODO(synk): kl_divergence() is a training-time scalar reduction over the
# parameters (no activations); it is left to plain JAX and not fused here.
# TODO(synk): bias=False variant not implemented (pass zeros for bias_mu and a
# very negative bias_log_sigma to emulate it).
# TODO(synk): optional bf16 cast of x / sampled W before dot_general would give
# ~3x MXU throughput on v6e/v7x; kept f32 here to match the f32 reference tightly.


if __name__ == "__main__":
    B, in_features, out_features = 8, 32, 16

    key = jax.random.PRNGKey(0)
    k_x, k_wmu, k_bmu, k_eps = jax.random.split(key, 4)

    stdv = 1.0 / math.sqrt(in_features)
    weight_mu = jax.random.uniform(k_wmu, (out_features, in_features), jnp.float32,
                                   minval=-stdv, maxval=stdv)
    weight_log_sigma = jnp.full((out_features, in_features), -5.0, jnp.float32)
    bias_mu = jax.random.uniform(k_bmu, (out_features,), jnp.float32,
                                 minval=-stdv, maxval=stdv)
    bias_log_sigma = jnp.full((out_features,), -5.0, jnp.float32)
    x = jax.random.normal(k_x, (B, in_features), jnp.float32)

    y = hierarchical_bayes_linear(x, weight_mu, weight_log_sigma,
                                  bias_mu, bias_log_sigma, k_eps)
    jax.block_until_ready(y)
    assert y.shape == (B, out_features)
    assert bool(jnp.all(jnp.isfinite(y)))

    # Same key -> same eps -> identical output.
    y2 = hierarchical_bayes_linear(x, weight_mu, weight_log_sigma,
                                   bias_mu, bias_log_sigma, k_eps)
    assert bool(jnp.array_equal(y, y2))

    # Deterministic-path check: with log_sigma -> -20 the noise term is ~2e-9,
    # so the kernel must match the plain linear forward tightly.
    y_det = hierarchical_bayes_linear(
        x, weight_mu, jnp.full_like(weight_log_sigma, -20.0),
        bias_mu, jnp.full_like(bias_log_sigma, -20.0), k_eps)
    y_ref = x @ weight_mu.T + bias_mu[None, :]
    assert bool(jnp.allclose(y_det, y_ref, atol=1e-4, rtol=1e-3))

    # Reparameterization check: kernel must equal the explicit JAX reparam forward
    # with the same eps draws.
    k_w, k_b = jax.random.split(k_eps)
    eps_w = jax.random.normal(k_w, (out_features, in_features), jnp.float32)
    eps_b = jax.random.normal(k_b, (out_features,), jnp.float32)
    w_s = weight_mu + jnp.exp(weight_log_sigma) * eps_w
    b_s = bias_mu + jnp.exp(bias_log_sigma) * eps_b
    y_full_ref = x @ w_s.T + b_s[None, :]
    assert bool(jnp.allclose(y, y_full_ref, atol=1e-4, rtol=1e-3))

    # Stochastic forward stays within a (very generous) noise envelope of the
    # mean forward: per-element std ~ exp(-5) * ||x_row|| ~ 0.04.
    assert float(jnp.max(jnp.abs(y - y_ref))) < 0.5

    print("KERNEL_OK")
</pallas_src>

<mosaic_0001>
module attributes {stable_mosaic.version = 11 : i64} {
  func.func @_sample_weight_kernel(%arg0: i32, %arg1: i32, %arg2: memref<128x128xf32, #tpu.memory_space<vmem>>, %arg3: memref<128x128xf32, #tpu.memory_space<vmem>>, %arg4: memref<128x128xf32, #tpu.memory_space<vmem>>, %arg5: memref<128x128xf32, #tpu.memory_space<vmem>>) attributes {dimension_semantics = [#tpu.dimension_semantics<parallel>, #tpu.dimension_semantics<parallel>], iteration_bounds = array<i64: 1, 1>, scalar_prefetch = 0 : i64, scratch_operands = 0 : i64, tpu.core_type = #tpu.core_type<tc>, window_params = [{transform_indices = @transform_0, window_bounds = array<i64: 128, 128>}, {transform_indices = @transform_1, window_bounds = array<i64: 128, 128>}, {transform_indices = @transform_2, window_bounds = array<i64: 128, 128>}, {transform_indices = @transform_3, window_bounds = array<i64: 128, 128>}]} {
    %c0 = arith.constant 0 : index
    %c0_0 = arith.constant 0 : index
    %0 = vector.load %arg2[%c0, %c0_0] : memref<128x128xf32, #tpu.memory_space<vmem>>, vector<128x128xf32>
    %c0_1 = arith.constant 0 : index
    %c0_2 = arith.constant 0 : index
    %1 = vector.load %arg3[%c0_1, %c0_2] : memref<128x128xf32, #tpu.memory_space<vmem>>, vector<128x128xf32>
    %2 = math.exp %1 : vector<128x128xf32>
    %c0_3 = arith.constant 0 : index
    %c0_4 = arith.constant 0 : index
    %3 = vector.load %arg4[%c0_3, %c0_4] : memref<128x128xf32, #tpu.memory_space<vmem>>, vector<128x128xf32>
    %4 = arith.mulf %2, %3 : vector<128x128xf32>
    %5 = arith.addf %0, %4 : vector<128x128xf32>
    %c0_5 = arith.constant 0 : index
    %c0_6 = arith.constant 0 : index
    %6 = vector.load %arg5[%c0_5, %c0_6] : memref<128x128xf32, #tpu.memory_space<vmem>>, vector<128x128xf32>
    tpu.vector_store %arg5[%c0_5, %c0_6], %5 {strides = array<i32>} : memref<128x128xf32, #tpu.memory_space<vmem>>, vector<128x128xf32>,
    return
  }
  func.func @transform_0(%arg0: i32, %arg1: i32) -> (i32, i32) {
    %c0_i32 = arith.constant 0 : i32
    return %arg0, %arg1 : i32, i32
  }
  func.func @transform_1(%arg0: i32, %arg1: i32) -> (i32, i32) {
    %c0_i32 = arith.constant 0 : i32
    return %arg0, %arg1 : i32, i32
  }
  func.func @transform_2(%arg0: i32, %arg1: i32) -> (i32, i32) {
    %c0_i32 = arith.constant 0 : i32
    return %arg0, %arg1 : i32, i32
  }
  func.func @transform_3(%arg0: i32, %arg1: i32) -> (i32, i32) {
    %c0_i32 = arith.constant 0 : i32
    return %arg0, %arg1 : i32, i32
  }
}

</mosaic_0001>

<llo_original>
// kernel: tpu_custom_call.1
$region0: #{tpu_custom_call.1}
  #allocation0 [shape = 'u32[]', space=smem, size = 0x4, offset = 0x4, fixed_abs, tag = 'smem constant byte address 0x4 - core index']
  #allocation1 [shape = 'u32[144,128]{1,0:T(1,128)}', space=vmem, size = 0x12000, scoped, tag = 'internal scratch']
  %s0 = inlined_call_operand.hbm [shape: f32[128,128], index: 0, kind: input, shape index: {}]
  %s1 = inlined_call_operand.hbm [shape: f32[128,128], index: 1, kind: input, shape index: {}]
  %s2 = inlined_call_operand.hbm [shape: f32[128,128], index: 2, kind: input, shape index: {}]
  %s3 = inlined_call_operand.hbm [shape: f32[128,128], index: 3, kind: output, shape index: {}]
  %s4 = sld [smem:[#allocation0]]
  $region34: #{tpu_custom_call.1} parent=0
    _
  %s6 = ssub.s32 1, %s4
  %s7 = scalar_select 0, %s6, %s4
  $region1: #{tpu_custom_call.1} parent=0
    #allocation2 [shape = 'u8[65536]{0}', space=vmem, size = 0x10000, scoped, tag = 'input window, operand 0, single buffered']
    #allocation3 [shape = 's32[1]{0}', space=sflag, size = 0x4, scoped, tag = 'scoped memory for tpu_custom_call.1']
    #allocation4 [shape = 's32[1]{0}', space=sflag, size = 0x4, scoped, tag = 'scoped memory for tpu_custom_call.1']
    #allocation5 [shape = 'u8[65536]{0}', space=vmem, size = 0x10000, scoped, tag = 'input window, operand 1, single buffered']
    #allocation6 [shape = 's32[1]{0}', space=sflag, size = 0x4, scoped, tag = 'scoped memory for tpu_custom_call.1']
    #allocation7 [shape = 'u8[65536]{0}', space=vmem, size = 0x10000, scoped, tag = 'input window, operand 2, single buffered']
    #allocation8 [shape = 'u8[65536]{0}', space=vmem, size = 0x10000, scoped, tag = 'output window, operand 0, single buffered']
    %8 = vsyncpa [#allocation3], 0
    %9 = vsyncpa [#allocation6], 0
    %10 = vsyncpa [#allocation4], 0
    // Predicated region
    $region2: #{tpu_custom_call.1} parent=1 // pred_check
      _
    $region3: #{tpu_custom_call.1} parent=1 // pred_check_branch
      %12 = sbr.rel (0) target = $region5
    $region4: #{tpu_custom_call.1} parent=1 // pred_region
      %s14 = ssub.s32 2048, 2048
      %15 = vsyncadd [#allocation3], %s14
      %s16 = sshll.u32 [#allocation2], 4
      %s17 = int_to_ptr.vmem [resolvable:$true] %s16
      %22 = dma.hbm_to_vmem [thread:$0]  %s0, 2048, %s17, [#allocation3], 128, 128, 8
    $region5: #{tpu_custom_call.1} parent=1 // pred_fallthru
      _
    // Predicated region
    $region6: #{tpu_custom_call.1} parent=1 // pred_check
      _
    $region7: #{tpu_custom_call.1} parent=1 // pred_check_branch
      %24 = sbr.rel (0) target = $region9
    $region8: #{tpu_custom_call.1} parent=1 // pred_region
      %s26 = ssub.s32 2048, 2048
      %27 = vsyncadd [#allocation6], %s26
      %s28 = sshll.u32 [#allocation5], 4
      %s29 = int_to_ptr.vmem [resolvable:$true] %s28
      %34 = dma.hbm_to_vmem [thread:$0]  %s1, 2048, %s29, [#allocation6], 128, 128, 8
    $region9: #{tpu_custom_call.1} parent=1 // pred_fallthru
      _
    // Predicated region
    $region10: #{tpu_custom_call.1} parent=1 // pred_check
      _
    $region11: #{tpu_custom_call.1} parent=1 // pred_check_branch
      %36 = sbr.rel (0) target = $region13
    $region12: #{tpu_custom_call.1} parent=1 // pred_region
      %s38 = ssub.s32 2048, 2048
      %39 = vsyncadd [#allocation6], %s38
      %s40 = sshll.u32 [#allocation7], 4
      %s41 = int_to_ptr.vmem [resolvable:$true] %s40
      %46 = dma.hbm_to_vmem [thread:$0]  %s2, 2048, %s41, [#allocation6], 128, 128, 8
    $region13: #{tpu_custom_call.1} parent=1 // pred_fallthru
      _
    // Predicated region
    $region14: #{tpu_custom_call.1} parent=1 // pred_check
      _
    $region15: #{tpu_custom_call.1} parent=1 // pred_check_branch
      %48 = sbr.rel (0) target = $region17
    $region16: #{tpu_custom_call.1} parent=1 // pred_region
      %49 = dma.done [#allocation3], 2048
    $region17: #{tpu_custom_call.1} parent=1 // pred_fallthru
      _
    // Predicated region
    $region18: #{tpu_custom_call.1} parent=1 // pred_check
      _
    $region19: #{tpu_custom_call.1} parent=1 // pred_check_branch
      %51 = sbr.rel (0) target = $region21
    $region20: #{tpu_custom_call.1} parent=1 // pred_region
      %52 = dma.done [#allocation6], 2048
    $region21: #{tpu_custom_call.1} parent=1 // pred_fallthru
      _
    // Predicated region
    $region22: #{tpu_custom_call.1} parent=1 // pred_check
      _
    $region23: #{tpu_custom_call.1} parent=1 // pred_check_branch
      %54 = sbr.rel (0) target = $region25
    $region24: #{tpu_custom_call.1} parent=1 // pred_region
      %55 = dma.done [#allocation6], 2048
    $region25: #{tpu_custom_call.1} parent=1 // pred_fallthru
      _
    %v56 = vld [vmem:[#allocation2] sm:$0xff]
    %v57 = vld [vmem:[#allocation2 + $0x8] sm:$0xff]
    %v58 = vld [vmem:[#allocation2 + $0x10] sm:$0xff]
    %v59 = vld [vmem:[#allocation2 + $0x18] sm:$0xff]
    %v60 = vld [vmem:[#allocation2 + $0x20] sm:$0xff]
    %v61 = vld [vmem:[#allocation2 + $0x28] sm:$0xff]
    %v62 = vld [vmem:[#allocation2 + $0x30] sm:$0xff]
    %v63 = vld [vmem:[#allocation2 + $0x38] sm:$0xff]
    %v64 = vld [vmem:[#allocation2 + $0x40] sm:$0xff]
    %v65 = vld [vmem:[#allocation2 + $0x48] sm:$0xff]
    %v66 = vld [vmem:[#allocation2 + $0x50] sm:$0xff]
    %v67 = vld [vmem:[#allocation2 + $0x58] sm:$0xff]
    %v68 = vld [vmem:[#allocation2 + $0x60] sm:$0xff]
    %v69 = vld [vmem:[#allocation2 + $0x68] sm:$0xff]
    %v70 = vld [vmem:[#allocation2 + $0x70] sm:$0xff]
    %v71 = vld [vmem:[#allocation2 + $0x78] sm:$0xff]
    %v72 = vld [vmem:[#allocation5] sm:$0xff]
    %v73 = vld [vmem:[#allocation5 + $0x8] sm:$0xff]
    %v74 = vld [vmem:[#allocation5 + $0x10] sm:$0xff]
    %v75 = vld [vmem:[#allocation5 + $0x18] sm:$0xff]
    %v76 = vld [vmem:[#allocation5 + $0x20] sm:$0xff]
    %v77 = vld [vmem:[#allocation5 + $0x28] sm:$0xff]
    %v78 = vld [vmem:[#allocation5 + $0x30] sm:$0xff]
    %v79 = vld [vmem:[#allocation5 + $0x38] sm:$0xff]
    %v80 = vld [vmem:[#allocation5 + $0x40] sm:$0xff]
    %v81 = vld [vmem:[#allocation5 + $0x48] sm:$0xff]
    %v82 = vld [vmem:[#allocation5 + $0x50] sm:$0xff]
    %v83 = vld [vmem:[#allocation5 + $0x58] sm:$0xff]
    %v84 = vld [vmem:[#allocation5 + $0x60] sm:$0xff]
    %v85 = vld [vmem:[#allocation5 + $0x68] sm:$0xff]
    %v86 = vld [vmem:[#allocation5 + $0x70] sm:$0xff]
    %v87 = vld [vmem:[#allocation5 + $0x78] sm:$0xff]
    %v88 = vmul.f32 %v72, 1.442695
    %v89 = vpow.pop %v88
    %v90 = vmul.f32 %v73, 1.442695
    %v91 = vpow.pop %v90
    %v92 = vmul.f32 %v74, 1.442695
    %v93 = vpow.pop %v92
    %v94 = vmul.f32 %v75, 1.442695
    %v95 = vpow.pop %v94
    %v96 = vmul.f32 %v76, 1.442695
    %v97 = vpow.pop %v96
    %v98 = vmul.f32 %v77, 1.442695
    %v99 = vpow.pop %v98
    %v100 = vmul.f32 %v78, 1.442695
    %v101 = vpow.pop %v100
    %v102 = vmul.f32 %v79, 1.442695
    %v103 = vpow.pop %v102
    %v104 = vmul.f32 %v80, 1.442695
    %v105 = vpow.pop %v104
    %v106 = vmul.f32 %v81, 1.442695
    %v107 = vpow.pop %v106
    %v108 = vmul.f32 %v82, 1.442695
    %v109 = vpow.pop %v108
    %v110 = vmul.f32 %v83, 1.442695
    %v111 = vpow.pop %v110
    %v112 = vmul.f32 %v84, 1.442695
    %v113 = vpow.pop %v112
    %v114 = vmul.f32 %v85, 1.442695
    %v115 = vpow.pop %v114
    %v116 = vmul.f32 %v86, 1.442695
    %v117 = vpow.pop %v116
    %v118 = vmul.f32 %v87, 1.442695
    %v119 = vpow.pop %v118
    %v120 = vld [vmem:[#allocation7] sm:$0xff]
    %v121 = vld [vmem:[#allocation7 + $0x8] sm:$0xff]
    %v122 = vld [vmem:[#allocation7 + $0x10] sm:$0xff]
    %v123 = vld [vmem:[#allocation7 + $0x18] sm:$0xff]
    %v124 = vld [vmem:[#allocation7 + $0x20] sm:$0xff]
    %v125 = vld [vmem:[#allocation7 + $0x28] sm:$0xff]
    %v126 = vld [vmem:[#allocation7 + $0x30] sm:$0xff]
    %v127 = vld [vmem:[#allocation7 + $0x38] sm:$0xff]
    %v128 = vld [vmem:[#allocation7 + $0x40] sm:$0xff]
    %v129 = vld [vmem:[#allocation7 + $0x48] sm:$0xff]
    %v130 = vld [vmem:[#allocation7 + $0x50] sm:$0xff]
    %v131 = vld [vmem:[#allocation7 + $0x58] sm:$0xff]
    %v132 = vld [vmem:[#allocation7 + $0x60] sm:$0xff]
    %v133 = vld [vmem:[#allocation7 + $0x68] sm:$0xff]
    %v134 = vld [vmem:[#allocation7 + $0x70] sm:$0xff]
    %v135 = vld [vmem:[#allocation7 + $0x78] sm:$0xff]
    %v136 = vmul.f32 %v89, %v120
    %v137 = vmul.f32 %v91, %v121
    %v138 = vmul.f32 %v93, %v122
    %v139 = vmul.f32 %v95, %v123
    %v140 = vmul.f32 %v97, %v124
    %v141 = vmul.f32 %v99, %v125
    %v142 = vmul.f32 %v101, %v126
    %v143 = vmul.f32 %v103, %v127
    %v144 = vmul.f32 %v105, %v128
    %v145 = vmul.f32 %v107, %v129
    %v146 = vmul.f32 %v109, %v130
    %v147 = vmul.f32 %v111, %v131
    %v148 = vmul.f32 %v113, %v132
    %v149 = vmul.f32 %v115, %v133
    %v150 = vmul.f32 %v117, %v134
    %v151 = vmul.f32 %v119, %v135
    %v152 = vadd.f32 %v56, %v136
    %v153 = vadd.f32 %v57, %v137
    %v154 = vadd.f32 %v58, %v138
    %v155 = vadd.f32 %v59, %v139
    %v156 = vadd.f32 %v60, %v140
    %v157 = vadd.f32 %v61, %v141
    %v158 = vadd.f32 %v62, %v142
    %v159 = vadd.f32 %v63, %v143
    %v160 = vadd.f32 %v64, %v144
    %v161 = vadd.f32 %v65, %v145
    %v162 = vadd.f32 %v66, %v146
    %v163 = vadd.f32 %v67, %v147
    %v164 = vadd.f32 %v68, %v148
    %v165 = vadd.f32 %v69, %v149
    %v166 = vadd.f32 %v70, %v150
    %v167 = vadd.f32 %v71, %v151
    %168 = vst [vmem:[#allocation8] sm:$0xff] %v152
    %169 = vst [vmem:[#allocation8 + $0x8] sm:$0xff] %v153
    %170 = vst [vmem:[#allocation8 + $0x10] sm:$0xff] %v154
    %171 = vst [vmem:[#allocation8 + $0x18] sm:$0xff] %v155
    %172 = vst [vmem:[#allocation8 + $0x20] sm:$0xff] %v156
    %173 = vst [vmem:[#allocation8 + $0x28] sm:$0xff] %v157
    %174 = vst [vmem:[#allocation8 + $0x30] sm:$0xff] %v158
    %175 = vst [vmem:[#allocation8 + $0x38] sm:$0xff] %v159
    %176 = vst [vmem:[#allocation8 + $0x40] sm:$0xff] %v160
    %177 = vst [vmem:[#allocation8 + $0x48] sm:$0xff] %v161
    %178 = vst [vmem:[#allocation8 + $0x50] sm:$0xff] %v162
    %179 = vst [vmem:[#allocation8 + $0x58] sm:$0xff] %v163
    %180 = vst [vmem:[#allocation8 + $0x60] sm:$0xff] %v164
    %181 = vst [vmem:[#allocation8 + $0x68] sm:$0xff] %v165
    %182 = vst [vmem:[#allocation8 + $0x70] sm:$0xff] %v166
    %183 = vst [vmem:[#allocation8 + $0x78] sm:$0xff] %v167
    // Predicated region
    $region26: #{tpu_custom_call.1} parent=1 // pred_check
      _
    $region27: #{tpu_custom_call.1} parent=1 // pred_check_branch
      %185 = sbr.rel (0) target = $region29
    $region28: #{tpu_custom_call.1} parent=1 // pred_region
      %s187 = ssub.s32 2048, 2048
      %188 = vsyncadd [#allocation4], %s187
      %s189 = sshll.u32 [#allocation8], 4
      %s190 = int_to_ptr.vmem [resolvable:$true] %s189
      %195 = dma.vmem_to_hbm [thread:$0]  %s190, 2048, %s3, [#allocation4], 128, 128, 8
    $region29: #{tpu_custom_call.1} parent=1 // pred_fallthru
      _
    // Predicated region
    $region30: #{tpu_custom_call.1} parent=1 // pred_check
      _
    $region31: #{tpu_custom_call.1} parent=1 // pred_check_branch
      %197 = sbr.rel (0) target = $region33
    $region32: #{tpu_custom_call.1} parent=1 // pred_region
      %198 = dma.done [#allocation4], 2048
    $region33: #{tpu_custom_call.1} parent=1 // pred_fallthru
      _
    %199 = vsyncpa [#allocation3], 1
    %200 = vsyncpa [#allocation6], 1
    %201 = vsyncpa [#allocation4], 1

</llo_original>
